<compile_context>
chip_gen: v6e
topology: v6e:2x2x1
jax: 0.10.0
libtpu: 0.0.40
codegen_flags: <defaults>
</compile_context>

<pallas_src>
import jax
import jax.numpy as jnp
from jax.experimental import pallas as pl
from jax.experimental.pallas import tpu as pltpu


def _round_up(x: int, m: int) -> int:
    return ((x + m - 1) // m) * m


def _alpha_blend_kernel(alpha_ref, pre_ref, post_ref, out_ref):
    # alpha_ref: (TR, 1) f32, sigmoid already applied (one value per (n, c) row)
    # pre_ref / post_ref / out_ref: (TR, TL) feature tiles
    a = alpha_ref[...]                              # (TR, 1) -> lane-broadcast
    pre = pre_ref[...].astype(jnp.float32)
    post = post_ref[...].astype(jnp.float32)
    # a * post + (1 - a) * pre  ==  pre + a * (post - pre)   (one broadcast, one FMA)
    out_ref[...] = (pre + a * (post - pre)).astype(out_ref.dtype)


def alpha_blending(alpha_raw, pre_features, post_features,
                   *, row_tile=256, lane_tile=1024):
    """alpha_raw: (C,) raw (pre-sigmoid) parameter.
    pre_features / post_features: (N, C, H, W), same dtype.
    Returns (N, C, H, W) blended features in the feature dtype."""
    N, C, H, W = pre_features.shape
    HW = H * W
    R = N * C
    dtype = pre_features.dtype
    itemsize = jnp.dtype(dtype).itemsize

    # ---- hoist sigmoid out of the kernel; per-row alpha column (f32) ----
    a = jax.nn.sigmoid(alpha_raw.astype(jnp.float32))            # (C,)
    alpha_col = jnp.broadcast_to(a[None, :], (N, C)).reshape(R, 1)

    pre2 = pre_features.reshape(R, HW)
    post2 = post_features.reshape(R, HW)

    # ---- pick 2D tiles: rows multiple of 8, lanes multiple of 128 ----
    TL = min(lane_tile, _round_up(HW, 128))     # lane tile (multiple of 128)
    TR = min(row_tile, _round_up(R, 8))         # row tile  (multiple of 8)
    HW_p = _round_up(HW, TL)
    R_p = _round_up(R, TR)

    # pad to tile multiples so every block (incl. boundary) is lane-dense
    if R_p != R or HW_p != HW:
        pre2 = jnp.pad(pre2, ((0, R_p - R), (0, HW_p - HW)))
        post2 = jnp.pad(post2, ((0, R_p - R), (0, HW_p - HW)))
    if R_p != R:
        alpha_col = jnp.pad(alpha_col, ((0, R_p - R), (0, 0)))

    grid = (R_p // TR, HW_p // TL)

    # ---- explicit VMEM budget: 3 streams x 2 buffers x tile + alpha ----
    tile_stream_bytes = TR * TL * itemsize
    vmem_need = 3 * 2 * tile_stream_bytes + 2 * TR * 4 + (1 << 20)
    vmem_limit = int(min(max(vmem_need, 16 << 20), 48 << 20))  # safe on v7x (64 MiB)

    cost = pl.CostEstimate(
        flops=2 * R * HW,
        transcendentals=0,
        bytes_accessed=3 * R * HW * itemsize,
    )

    out = pl.pallas_call(
        _alpha_blend_kernel,
        out_shape=jax.ShapeDtypeStruct((R_p, HW_p), dtype),
        grid_spec=pltpu.PrefetchScalarGridSpec(
            num_scalar_prefetch=0,
            grid=grid,
            in_specs=[
                # per-row alpha column: depends only on the row-block index
                pl.BlockSpec((TR, 1), lambda i, j: (i, 0)),
                pl.BlockSpec((TR, TL), lambda i, j: (i, j)),
                pl.BlockSpec((TR, TL), lambda i, j: (i, j)),
            ],
            out_specs=pl.BlockSpec((TR, TL), lambda i, j: (i, j)),
        ),
        compiler_params=pltpu.CompilerParams(
            dimension_semantics=("parallel", "parallel"),
            vmem_limit_bytes=vmem_limit,
        ),
        cost_estimate=cost,
    )(alpha_col, pre2, post2)

    # strip padding, restore NCHW
    return out[:R, :HW].reshape(N, C, H, W)


def _reference(alpha_raw, pre, post):
    a = jax.nn.sigmoid(alpha_raw.astype(jnp.float32)).reshape(1, -1, 1, 1)
    return (a * post.astype(jnp.float32)
            + (1.0 - a) * pre.astype(jnp.float32)).astype(pre.dtype)


if __name__ == "__main__":
    # Module config: features_size = C (per-channel alpha), alpha_init = 0.5
    alpha_init = 0.5
    key = jax.random.PRNGKey(0)

    # Main case: N=2, C=4, H=W=16  (HW = 256, already a multiple of 128)
    N, C, H, W = 2, 4, 16, 16
    k1, k2 = jax.random.split(key)
    pre = jax.random.normal(k1, (N, C, H, W), dtype=jnp.float32)
    post = jax.random.normal(k2, (N, C, H, W), dtype=jnp.float32)
    alpha_raw = jnp.ones((C,), dtype=jnp.float32) * alpha_init  # torch.ones(C)*alpha_init

    out = alpha_blending(alpha_raw, pre, post)
    out = jax.block_until_ready(out)
    ref = _reference(alpha_raw, pre, post)
    assert jnp.allclose(out, ref, atol=1e-6, rtol=1e-6), "mismatch vs reference (f32)"

    # Secondary case: non-128-multiple spatial size exercises the lane-padding path
    N2, C2, H2, W2 = 2, 4, 10, 12
    k3, k4 = jax.random.split(k2)
    pre2 = jax.random.normal(k3, (N2, C2, H2, W2), dtype=jnp.float32)
    post2 = jax.random.normal(k4, (N2, C2, H2, W2), dtype=jnp.float32)
    alpha_raw2 = jnp.ones((C2,), dtype=jnp.float32) * alpha_init

    out2 = alpha_blending(alpha_raw2, pre2, post2)
    out2 = jax.block_until_ready(out2)
    ref2 = _reference(alpha_raw2, pre2, post2)
    assert jnp.allclose(out2, ref2, atol=1e-6, rtol=1e-6), "mismatch vs reference (padded)"

    # TODO(synk): non-learnable path (scalar alpha, no sigmoid) is the same stream
    # with a scalar broadcast; not exercised here since the module defaults to learnable.
    print("KERNEL_OK")
</pallas_src>

<mosaic_0001>
module attributes {stable_mosaic.version = 11 : i64} {
  func.func @_alpha_blend_kernel(%arg0: i32, %arg1: i32, %arg2: memref<8x1xf32, #tpu.memory_space<vmem>>, %arg3: memref<8x256xf32, #tpu.memory_space<vmem>>, %arg4: memref<8x256xf32, #tpu.memory_space<vmem>>, %arg5: memref<8x256xf32, #tpu.memory_space<vmem>>) attributes {dimension_semantics = [#tpu.dimension_semantics<parallel>, #tpu.dimension_semantics<parallel>], iteration_bounds = array<i64: 1, 1>, scalar_prefetch = 0 : i64, scratch_operands = 0 : i64, tpu.core_type = #tpu.core_type<tc>, window_params = [{transform_indices = @transform_0, window_bounds = array<i64: 8, 1>}, {transform_indices = @transform_1, window_bounds = array<i64: 8, 256>}, {transform_indices = @transform_2, window_bounds = array<i64: 8, 256>}, {transform_indices = @transform_3, window_bounds = array<i64: 8, 256>}]} {
    %c0 = arith.constant 0 : index
    %c0_0 = arith.constant 0 : index
    %0 = vector.load %arg2[%c0, %c0_0] : memref<8x1xf32, #tpu.memory_space<vmem>>, vector<8x1xf32>
    %c0_1 = arith.constant 0 : index
    %c0_2 = arith.constant 0 : index
    %1 = vector.load %arg3[%c0_1, %c0_2] : memref<8x256xf32, #tpu.memory_space<vmem>>, vector<8x256xf32>
    %c0_3 = arith.constant 0 : index
    %c0_4 = arith.constant 0 : index
    %2 = vector.load %arg4[%c0_3, %c0_4] : memref<8x256xf32, #tpu.memory_space<vmem>>, vector<8x256xf32>
    %3 = arith.subf %2, %1 : vector<8x256xf32>
    %4 = vector.broadcast %0 : vector<8x1xf32> to vector<8x256xf32>
    %5 = arith.mulf %4, %3 : vector<8x256xf32>
    %6 = arith.addf %1, %5 : vector<8x256xf32>
    %c0_5 = arith.constant 0 : index
    %c0_6 = arith.constant 0 : index
    %7 = vector.load %arg5[%c0_5, %c0_6] : memref<8x256xf32, #tpu.memory_space<vmem>>, vector<8x256xf32>
    tpu.vector_store %arg5[%c0_5, %c0_6], %6 {strides = array<i32>} : memref<8x256xf32, #tpu.memory_space<vmem>>, vector<8x256xf32>,
    return
  }
  func.func @transform_0(%arg0: i32, %arg1: i32) -> (i32, i32) {
    %c0_i32 = arith.constant 0 : i32
    %c0_i32_0 = arith.constant 0 : i32
    return %arg0, %c0_i32 : i32, i32
  }
  func.func @transform_1(%arg0: i32, %arg1: i32) -> (i32, i32) {
    %c0_i32 = arith.constant 0 : i32
    return %arg0, %arg1 : i32, i32
  }
  func.func @transform_2(%arg0: i32, %arg1: i32) -> (i32, i32) {
    %c0_i32 = arith.constant 0 : i32
    return %arg0, %arg1 : i32, i32
  }
  func.func @transform_3(%arg0: i32, %arg1: i32) -> (i32, i32) {
    %c0_i32 = arith.constant 0 : i32
    return %arg0, %arg1 : i32, i32
  }
}

</mosaic_0001>

<llo_original>
// kernel: tpu_custom_call.1
$region0: #{tpu_custom_call.1}
  #allocation0 [shape = 'u32[]', space=smem, size = 0x4, offset = 0x4, fixed_abs, tag = 'smem constant byte address 0x4 - core index']
  #allocation1 [shape = 'u32[144,128]{1,0:T(1,128)}', space=vmem, size = 0x12000, scoped, tag = 'internal scratch']
  %s0 = inlined_call_operand.vmem [shape: f32[8,1], index: 0, kind: input, shape index: {}]
  %s1 = inlined_call_operand.hbm [shape: f32[8,256], index: 1, kind: input, shape index: {}]
  %s2 = inlined_call_operand.hbm [shape: f32[8,256], index: 2, kind: input, shape index: {}]
  %s3 = inlined_call_operand.hbm [shape: f32[8,256], index: 3, kind: output, shape index: {}]
  %s4 = sld [smem:[#allocation0]]
  $region30: #{tpu_custom_call.1} parent=0
    _
  %s6 = ssub.s32 1, %s4
  %s7 = scalar_select 0, %s6, %s4
  $region1: #{tpu_custom_call.1} parent=0
    #allocation2 [shape = 'u8[8192]{0}', space=vmem, size = 0x2000, scoped, tag = 'input window, operand 1, single buffered']
    #allocation3 [shape = 's32[1]{0}', space=sflag, size = 0x4, scoped, tag = 'scoped memory for tpu_custom_call.1']
    #allocation4 [shape = 's32[1]{0}', space=sflag, size = 0x4, scoped, tag = 'scoped memory for tpu_custom_call.1']
    #allocation5 [shape = 'u8[8192]{0}', space=vmem, size = 0x2000, scoped, tag = 'input window, operand 2, single buffered']
    #allocation6 [shape = 's32[1]{0}', space=sflag, size = 0x4, scoped, tag = 'scoped memory for tpu_custom_call.1']
    #allocation7 [shape = 'u8[8192]{0}', space=vmem, size = 0x2000, scoped, tag = 'output window, operand 0, single buffered']
    %8 = vsyncpa [#allocation3], 0
    %9 = vsyncpa [#allocation6], 0
    %10 = vsyncpa [#allocation4], 0
    // Predicated region
    $region2: #{tpu_custom_call.1} parent=1 // pred_check
      _
    $region3: #{tpu_custom_call.1} parent=1 // pred_check_branch
      %12 = sbr.rel (0) target = $region5
    $region4: #{tpu_custom_call.1} parent=1 // pred_region
      _
    $region5: #{tpu_custom_call.1} parent=1 // pred_fallthru
      _
    // Predicated region
    $region6: #{tpu_custom_call.1} parent=1 // pred_check
      _
    $region7: #{tpu_custom_call.1} parent=1 // pred_check_branch
      %14 = sbr.rel (0) target = $region9
    $region8: #{tpu_custom_call.1} parent=1 // pred_region
      %s16 = ssub.s32 256, 256
      %17 = vsyncadd [#allocation3], %s16
      %s19 = sshll.u32 [#allocation2], 4
      %s20 = int_to_ptr.vmem [resolvable:$true] %s19
      %22 = dma.hbm_to_vmem [thread:$0]  %s1, 256, %s20, [#allocation3]
    $region9: #{tpu_custom_call.1} parent=1 // pred_fallthru
      _
    // Predicated region
    $region10: #{tpu_custom_call.1} parent=1 // pred_check
      _
    $region11: #{tpu_custom_call.1} parent=1 // pred_check_branch
      %24 = sbr.rel (0) target = $region13
    $region12: #{tpu_custom_call.1} parent=1 // pred_region
      %s26 = ssub.s32 256, 256
      %27 = vsyncadd [#allocation6], %s26
      %s29 = sshll.u32 [#allocation5], 4
      %s30 = int_to_ptr.vmem [resolvable:$true] %s29
      %32 = dma.hbm_to_vmem [thread:$0]  %s2, 256, %s30, [#allocation6]
    $region13: #{tpu_custom_call.1} parent=1 // pred_fallthru
      _
    // Predicated region
    $region14: #{tpu_custom_call.1} parent=1 // pred_check
      _
    $region15: #{tpu_custom_call.1} parent=1 // pred_check_branch
      %34 = sbr.rel (0) target = $region17
    $region16: #{tpu_custom_call.1} parent=1 // pred_region
      %35 = dma.done [#allocation3], 256
    $region17: #{tpu_custom_call.1} parent=1 // pred_fallthru
      _
    // Predicated region
    $region18: #{tpu_custom_call.1} parent=1 // pred_check
      _
    $region19: #{tpu_custom_call.1} parent=1 // pred_check_branch
      %37 = sbr.rel (0) target = $region21
    $region20: #{tpu_custom_call.1} parent=1 // pred_region
      %38 = dma.done [#allocation6], 256
    $region21: #{tpu_custom_call.1} parent=1 // pred_fallthru
      _
    %v39 = vld [vmem:[%s0] sm:$0xff]
    %v40 = vld [vmem:[#allocation2] sm:$0xff]
    %v41 = vld [vmem:[#allocation2 + $0x8] sm:$0xff]
    %v42 = vld [vmem:[#allocation5] sm:$0xff]
    %v43 = vld [vmem:[#allocation5 + $0x8] sm:$0xff]
    %v44 = vsub.f32 %v42, %v40
    %v45 = vsub.f32 %v43, %v41
    %47 = vset.pattern.permute.xlu0 0
    %48 = vperm.xlu0 %47, %v39
    %v49 = vpop.permute.xlu0 %48
    %v51 = vmul.f32 %v49, %v44
    %v52 = vmul.f32 %v49, %v45
    %v53 = vadd.f32 %v40, %v51
    %v54 = vadd.f32 %v41, %v52
    %55 = vst [vmem:[#allocation7] sm:$0xff] %v53
    %56 = vst [vmem:[#allocation7 + $0x8] sm:$0xff] %v54
    // Predicated region
    $region22: #{tpu_custom_call.1} parent=1 // pred_check
      _
    $region23: #{tpu_custom_call.1} parent=1 // pred_check_branch
      %58 = sbr.rel (0) target = $region25
    $region24: #{tpu_custom_call.1} parent=1 // pred_region
      %s60 = ssub.s32 256, 256
      %61 = vsyncadd [#allocation4], %s60
      %s63 = sshll.u32 [#allocation7], 4
      %s64 = int_to_ptr.vmem [resolvable:$true] %s63
      %66 = dma.vmem_to_hbm [thread:$0]  %s64, 256, %s3, [#allocation4]
    $region25: #{tpu_custom_call.1} parent=1 // pred_fallthru
      _
    // Predicated region
    $region26: #{tpu_custom_call.1} parent=1 // pred_check
      _
    $region27: #{tpu_custom_call.1} parent=1 // pred_check_branch
      %68 = sbr.rel (0) target = $region29
    $region28: #{tpu_custom_call.1} parent=1 // pred_region
      %69 = dma.done [#allocation4], 256
    $region29: #{tpu_custom_call.1} parent=1 // pred_fallthru
      _
    %70 = vsyncpa [#allocation3], 1
    %71 = vsyncpa [#allocation6], 1
    %72 = vsyncpa [#allocation4], 1

</llo_original>
